<compile_context>
chip_gen: v7x
topology: tpu7x:2x2x1
jax: 0.10.0
libtpu: 0.0.40
codegen_flags: <defaults>
</compile_context>

<pallas_src>
import math

import jax
import jax.numpy as jnp
from jax.experimental import pallas as pl
from jax.experimental.pallas import tpu as pltpu

SQRT_2_OVER_PI = math.sqrt(2.0 / math.pi)


def _gelu(x):
    # BERT tanh-approximation GELU, identical to the PyTorch GELU module.
    return 0.5 * x * (1.0 + jnp.tanh(SQRT_2_OVER_PI * (x + 0.044715 * x * x * x)))


def _score_kernel(x_ref, m_ref,
                  w1_ref, b1_ref, w2_ref, b2_ref, w3_ref, b3_ref,
                  out_ref, acc_ref):
    """One (batch-tile, time-tile) grid step.

    x_ref   : (tb, tt, D)  am_outputs tile, native dtype (f32 or bf16)
    m_ref   : (tb, tt)     f32 mask tile, pre-scaled by 1/valid_len
    w*/b*   : f32 MLP params, resident (constant block index)
    out_ref : (tb, 1)      f32 scores, written only on the last time step
    acc_ref : (tb, D)      f32 scratch accumulator for the masked time-mean
    """
    t = pl.program_id(1)

    @pl.when(t == 0)
    def _init():
        acc_ref[...] = jnp.zeros_like(acc_ref)

    # Masked mean-pool partial sum for this time tile (pure VPU + f32 reduce):
    #   acc[b, d] += sum_t (m[b, t] / len[b]) * x[b, t, d]
    xf = x_ref[...].astype(jnp.float32)              # (tb, tt, D) f32
    m = m_ref[...][:, :, None]                       # (tb, tt, 1) f32
    acc_ref[...] += jnp.sum(xf * m, axis=1)          # (tb, D) f32

    # Finalize: 3-layer GELU MLP head on the pooled features (runs once per
    # batch tile; tiny matmuls, all f32 with MXU f32 accumulation).
    @pl.when(t == pl.num_programs(1) - 1)
    def _finalize():
        pooled = acc_ref[...]                        # (tb, D) f32, already the mean
        h1 = _gelu(jnp.dot(pooled, w1_ref[...],
                           preferred_element_type=jnp.float32) + b1_ref[...])
        h2 = _gelu(jnp.dot(h1, w2_ref[...],
                           preferred_element_type=jnp.float32) + b2_ref[...])
        o = jnp.dot(h2, w3_ref[...],
                    preferred_element_type=jnp.float32) + b3_ref[...]
        out_ref[...] = o.astype(out_ref.dtype)


def _pick_batch_tile(B):
    # Prefer >=2 batch tiles so the "parallel" batch axis has something to
    # split across TensorCores on v7x megacore, while keeping tiles large.
    for tb in (64, 32, 16, 8):
        if B % tb == 0 and B // tb >= 2:
            return tb
    for tb in (64, 32, 16, 8):
        if B % tb == 0:
            return tb
    return B


def _pick_time_tile(T, tb, D, itemsize, budget_bytes=4 * 1024 * 1024):
    # Largest 128-multiple divisor of T whose single x tile stays well under
    # the scoped-VMEM limit (the pipeline double-buffers it), so it also fits
    # v7x's smaller 64 MiB VMEM with room for weights + accumulator.  Per-step
    # overhead is ~0.35 us, so bigger tiles amortize it better.
    for tt in range(1024, 127, -128):
        if T % tt == 0 and tb * tt * D * itemsize <= budget_bytes:
            return tt
    return T   # small / awkward T: take the whole time axis as one block


def score_generator(am_outputs, masks, params, *, batch_tile=None, time_tile=None):
    """Returns (scores, sigmoid(scores)), each of shape (B,)."""
    B, T, D = am_outputs.shape
    w1, b1, w2, b2, w3, b3 = params

    # masks.squeeze(1) as f32, with 1/valid_len folded in once on the host
    # side so the kernel's reduction directly produces the masked mean.
    # NOTE: like the PyTorch reference, a fully-masked row yields nan.
    m2d = masks.reshape(B, T).astype(jnp.float32)
    cnt = jnp.sum(m2d, axis=1, keepdims=True)                 # (B, 1) f32
    scaled_m = m2d / cnt                                      # (B, T) f32

    tb = batch_tile if batch_tile is not None else _pick_batch_tile(B)
    tt = time_tile if time_tile is not None else _pick_time_tile(
        T, tb, D, am_outputs.dtype.itemsize)
    assert B % tb == 0 and T % tt == 0, (B, tb, T, tt)
    nb, nt = B // tb, T // tt

    x_spec = pl.BlockSpec((tb, tt, D), lambda b, t: (b, t, 0))
    m_spec = pl.BlockSpec((tb, tt), lambda b, t: (b, t))
    # MLP params: constant block index -> DMA'd once, resident across the grid.
    w_specs = [pl.BlockSpec(p.shape, lambda b, t: (0, 0))
               for p in (w1, b1, w2, b2, w3, b3)]
    out_spec = pl.BlockSpec((tb, 1), lambda b, t: (b, 0))

    # TODO(synk): for production D not a multiple of 128, zero-pad the weights
    # once at init so the three MXU matmuls run with full lane occupancy.
    out = pl.pallas_call(
        _score_kernel,
        out_shape=jax.ShapeDtypeStruct((B, 1), jnp.float32),
        grid_spec=pltpu.PrefetchScalarGridSpec(
            num_scalar_prefetch=0,
            grid=(nb, nt),
            in_specs=[x_spec, m_spec] + w_specs,
            out_specs=out_spec,
            scratch_shapes=[pltpu.VMEM((tb, D), jnp.float32)],
        ),
        compiler_params=pltpu.CompilerParams(
            dimension_semantics=("parallel", "arbitrary"),
            vmem_limit_bytes=32 * 1024 * 1024,
        ),
    )(am_outputs, scaled_m, w1, b1, w2, b2, w3, b3)

    scores = out[:, 0]                                        # .squeeze(-1)
    return scores, jax.nn.sigmoid(scores)


def init_params(key, d_model):
    """Deterministic Linear params (PyTorch-style uniform(-1/sqrt(fan_in), ...))."""
    dims = [(d_model, d_model // 2), (d_model // 2, d_model // 4), (d_model // 4, 1)]
    params = []
    for i, (fan_in, fan_out) in enumerate(dims):
        kw, kb = jax.random.split(jax.random.fold_in(key, i))
        bound = 1.0 / math.sqrt(fan_in)
        # W stored already transposed to (in, out) for x @ W
        w = jax.random.uniform(kw, (fan_in, fan_out), jnp.float32, -bound, bound)
        b = jax.random.uniform(kb, (1, fan_out), jnp.float32, -bound, bound)
        params += [w, b]
    return tuple(params)


def _reference(am_outputs, masks, params):
    """Pure-JAX reference mirroring the PyTorch forward."""
    w1, b1, w2, b2, w3, b3 = params
    m = masks[:, 0, :]
    x = jnp.where((m == 1)[:, :, None], am_outputs.astype(jnp.float32), 0.0)
    pooled = x.sum(1) / m.sum(1, keepdims=True).astype(jnp.float32)
    h1 = _gelu(pooled @ w1 + b1)
    h2 = _gelu(h1 @ w2 + b2)
    o = h2 @ w3 + b3
    return o[:, 0], jax.nn.sigmoid(o)[:, 0]


if __name__ == "__main__":
    key = jax.random.PRNGKey(0)

    # --- test 1: small shapes, single-block grid (1, 1), f32 -----------------
    B, T, D = 2, 8, 32
    k_x, k_p = jax.random.split(key)
    am_outputs = jax.random.normal(k_x, (B, T, D), jnp.float32)
    lengths = jnp.array([8, 5], dtype=jnp.int32)
    masks = (jnp.arange(T)[None, :] < lengths[:, None]).astype(jnp.int32)[:, None, :]
    params = init_params(k_p, D)

    scores, probs = score_generator(am_outputs, masks, params)
    jax.block_until_ready((scores, probs))
    ref_s, ref_p = _reference(am_outputs, masks, params)
    assert scores.shape == (B,) and probs.shape == (B,)
    assert jnp.allclose(scores, ref_s, rtol=1e-5, atol=1e-5)
    assert jnp.allclose(probs, ref_p, rtol=1e-5, atol=1e-5)

    # --- test 2: exercise the 2-D grid (batch x time tiles), f32 -------------
    B2, T2, D2 = 16, 256, 32
    k_x2, k_p2, k_l2 = jax.random.split(jax.random.fold_in(key, 7), 3)
    x2 = jax.random.normal(k_x2, (B2, T2, D2), jnp.float32)
    len2 = jax.random.randint(k_l2, (B2,), 1, T2 + 1)
    masks2 = (jnp.arange(T2)[None, :] < len2[:, None]).astype(jnp.int32)[:, None, :]
    params2 = init_params(k_p2, D2)

    s2, p2 = score_generator(x2, masks2, params2, batch_tile=8, time_tile=128)
    jax.block_until_ready((s2, p2))
    r2s, r2p = _reference(x2, masks2, params2)
    assert jnp.allclose(s2, r2s, rtol=1e-4, atol=1e-4)
    assert jnp.allclose(p2, r2p, rtol=1e-4, atol=1e-4)

    # --- test 3: bf16 activations streamed natively, f32 accumulation --------
    x2_bf16 = x2.astype(jnp.bfloat16)
    s3, p3 = score_generator(x2_bf16, masks2, params2, batch_tile=8, time_tile=128)
    jax.block_until_ready((s3, p3))
    r3s, r3p = _reference(x2_bf16, masks2, params2)
    assert jnp.allclose(s3, r3s, rtol=1e-2, atol=1e-2)
    assert jnp.allclose(p3, r3p, rtol=1e-2, atol=1e-2)

    # --- test 4: default tile picker path (no explicit tiles), f32 -----------
    s4, p4 = score_generator(x2, masks2, params2)
    jax.block_until_ready((s4, p4))
    assert jnp.allclose(s4, r2s, rtol=1e-4, atol=1e-4)
    assert jnp.allclose(p4, r2p, rtol=1e-4, atol=1e-4)

    print("KERNEL_OK")
</pallas_src>

<mosaic_0001>
module attributes {stable_mosaic.version = 11 : i64} {
  func.func @_score_kernel(%arg0: i32, %arg1: i32, %arg2: memref<2x8x32xf32, #tpu.memory_space<vmem>>, %arg3: memref<2x8xf32, #tpu.memory_space<vmem>>, %arg4: memref<32x16xf32, #tpu.memory_space<vmem>>, %arg5: memref<1x16xf32, #tpu.memory_space<vmem>>, %arg6: memref<16x8xf32, #tpu.memory_space<vmem>>, %arg7: memref<1x8xf32, #tpu.memory_space<vmem>>, %arg8: memref<8x1xf32, #tpu.memory_space<vmem>>, %arg9: memref<1x1xf32, #tpu.memory_space<vmem>>, %arg10: memref<2x1xf32, #tpu.memory_space<vmem>>, %arg11: memref<2x32xf32, #tpu.memory_space<vmem>>) attributes {dimension_semantics = [#tpu.dimension_semantics<parallel>, #tpu.dimension_semantics<arbitrary>], iteration_bounds = array<i64: 1, 1>, scalar_prefetch = 0 : i64, scratch_operands = 1 : i64, tpu.core_type = #tpu.core_type<tc>, window_params = [{transform_indices = @transform_0, window_bounds = array<i64: 2, 8, 32>}, {transform_indices = @transform_1, window_bounds = array<i64: 2, 8>}, {pipeline_mode = #tpu.pipeline_mode<synchronous>, transform_indices = @transform_2, window_bounds = array<i64: 32, 16>}, {pipeline_mode = #tpu.pipeline_mode<synchronous>, transform_indices = @transform_3, window_bounds = array<i64: 1, 16>}, {pipeline_mode = #tpu.pipeline_mode<synchronous>, transform_indices = @transform_4, window_bounds = array<i64: 16, 8>}, {pipeline_mode = #tpu.pipeline_mode<synchronous>, transform_indices = @transform_5, window_bounds = array<i64: 1, 8>}, {pipeline_mode = #tpu.pipeline_mode<synchronous>, transform_indices = @transform_6, window_bounds = array<i64: 8, 1>}, {pipeline_mode = #tpu.pipeline_mode<synchronous>, transform_indices = @transform_7, window_bounds = array<i64: 1, 1>}, {transform_indices = @transform_8, window_bounds = array<i64: 2, 1>}]} {
    %c0_i32 = arith.constant 0 : i32
    %0 = arith.cmpi eq, %arg1, %c0_i32 : i32
    %1 = arith.extui %0 : i1 to i32
    %c0_i32_0 = arith.constant 0 : i32
    %2 = arith.cmpi ne, %1, %c0_i32_0 : i32
    scf.if %2 {
      %cst_11 = arith.constant 0.000000e+00 : f32
      %15 = vector.broadcast %cst_11 : f32 to vector<2x32xf32>
      %c0_12 = arith.constant 0 : index
      %c0_13 = arith.constant 0 : index
      %16 = vector.load %arg11[%c0_12, %c0_13] : memref<2x32xf32, #tpu.memory_space<vmem>>, vector<2x32xf32>
      tpu.vector_store %arg11[%c0_12, %c0_13], %15 {strides = array<i32>} : memref<2x32xf32, #tpu.memory_space<vmem>>, vector<2x32xf32>,
    } else {
    }
    %c0 = arith.constant 0 : index
    %c0_1 = arith.constant 0 : index
    %c0_2 = arith.constant 0 : index
    %3 = vector.load %arg2[%c0, %c0_1, %c0_2] : memref<2x8x32xf32, #tpu.memory_space<vmem>>, vector<2x8x32xf32>
    %c0_3 = arith.constant 0 : index
    %c0_4 = arith.constant 0 : index
    %4 = vector.load %arg3[%c0_3, %c0_4] : memref<2x8xf32, #tpu.memory_space<vmem>>, vector<2x8xf32>
    %5 = vector.shape_cast %4 : vector<2x8xf32> to vector<2x8x1xf32>
    %c0_5 = arith.constant 0 : index
    %c0_6 = arith.constant 0 : index
    %6 = vector.load %arg11[%c0_5, %c0_6] : memref<2x32xf32, #tpu.memory_space<vmem>>, vector<2x32xf32>
    %7 = vector.broadcast %5 : vector<2x8x1xf32> to vector<2x8x32xf32>
    %8 = arith.mulf %3, %7 : vector<2x8x32xf32>
    %cst = arith.constant dense<0.000000e+00> : vector<2x32xf32>
    %9 = vector.multi_reduction <add>, %8, %cst [1] : vector<2x8x32xf32> to vector<2x32xf32>
    %10 = arith.addf %6, %9 : vector<2x32xf32>
    %c0_7 = arith.constant 0 : index
    %c0_8 = arith.constant 0 : index
    %11 = vector.load %arg11[%c0_7, %c0_8] : memref<2x32xf32, #tpu.memory_space<vmem>>, vector<2x32xf32>
    tpu.vector_store %arg11[%c0_7, %c0_8], %10 {strides = array<i32>} : memref<2x32xf32, #tpu.memory_space<vmem>>, vector<2x32xf32>,
    %c0_i32_9 = arith.constant 0 : i32
    %12 = arith.cmpi eq, %arg1, %c0_i32_9 : i32
    %13 = arith.extui %12 : i1 to i32
    %c0_i32_10 = arith.constant 0 : i32
    %14 = arith.cmpi ne, %13, %c0_i32_10 : i32
    scf.if %14 {
      %c0_11 = arith.constant 0 : index
      %c0_12 = arith.constant 0 : index
      %15 = vector.load %arg11[%c0_11, %c0_12] : memref<2x32xf32, #tpu.memory_space<vmem>>, vector<2x32xf32>
      %c0_13 = arith.constant 0 : index
      %c0_14 = arith.constant 0 : index
      %16 = vector.load %arg4[%c0_13, %c0_14] : memref<32x16xf32, #tpu.memory_space<vmem>>, vector<32x16xf32>
      %cst_15 = arith.constant dense<0.000000e+00> : vector<2x16xf32>
      %17 = tpu.matmul %15, %16, %cst_15 {dimension_numbers = #tpu.dot_dimension_numbers<[1], [0], [0], [1], [0, 0, 1, 1], [], []>} : vector<2x32xf32>, vector<32x16xf32>, vector<2x16xf32> -> vector<2x16xf32>
      %c0_16 = arith.constant 0 : index
      %c0_17 = arith.constant 0 : index
      %18 = vector.load %arg5[%c0_16, %c0_17] : memref<1x16xf32, #tpu.memory_space<vmem>>, vector<1x16xf32>
      %19 = vector.broadcast %18 : vector<1x16xf32> to vector<2x16xf32>
      %20 = arith.addf %17, %19 : vector<2x16xf32>
      %cst_18 = arith.constant 5.000000e-01 : f32
      %21 = vector.broadcast %cst_18 : f32 to vector<2x16xf32>
      %22 = arith.mulf %21, %20 : vector<2x16xf32>
      %cst_19 = arith.constant 4.471500e-02 : f32
      %23 = vector.broadcast %cst_19 : f32 to vector<2x16xf32>
      %24 = arith.mulf %23, %20 : vector<2x16xf32>
      %25 = arith.mulf %24, %20 : vector<2x16xf32>
      %26 = arith.mulf %25, %20 : vector<2x16xf32>
      %27 = arith.addf %20, %26 : vector<2x16xf32>
      %cst_20 = arith.constant 0.797884583 : f32
      %28 = vector.broadcast %cst_20 : f32 to vector<2x16xf32>
      %29 = arith.mulf %28, %27 : vector<2x16xf32>
      %30 = math.tanh %29 : vector<2x16xf32>
      %cst_21 = arith.constant 1.000000e+00 : f32
      %31 = vector.broadcast %cst_21 : f32 to vector<2x16xf32>
      %32 = arith.addf %31, %30 : vector<2x16xf32>
      %33 = arith.mulf %22, %32 : vector<2x16xf32>
      %c0_22 = arith.constant 0 : index
      %c0_23 = arith.constant 0 : index
      %34 = vector.load %arg6[%c0_22, %c0_23] : memref<16x8xf32, #tpu.memory_space<vmem>>, vector<16x8xf32>
      %cst_24 = arith.constant dense<0.000000e+00> : vector<2x8xf32>
      %35 = tpu.matmul %33, %34, %cst_24 {dimension_numbers = #tpu.dot_dimension_numbers<[1], [0], [0], [1], [0, 0, 1, 1], [], []>} : vector<2x16xf32>, vector<16x8xf32>, vector<2x8xf32> -> vector<2x8xf32>
      %c0_25 = arith.constant 0 : index
      %c0_26 = arith.constant 0 : index
      %36 = vector.load %arg7[%c0_25, %c0_26] : memref<1x8xf32, #tpu.memory_space<vmem>>, vector<1x8xf32>
      %37 = vector.broadcast %36 : vector<1x8xf32> to vector<2x8xf32>
      %38 = arith.addf %35, %37 : vector<2x8xf32>
      %cst_27 = arith.constant 5.000000e-01 : f32
      %39 = vector.broadcast %cst_27 : f32 to vector<2x8xf32>
      %40 = arith.mulf %39, %38 : vector<2x8xf32>
      %cst_28 = arith.constant 4.471500e-02 : f32
      %41 = vector.broadcast %cst_28 : f32 to vector<2x8xf32>
      %42 = arith.mulf %41, %38 : vector<2x8xf32>
      %43 = arith.mulf %42, %38 : vector<2x8xf32>
      %44 = arith.mulf %43, %38 : vector<2x8xf32>
      %45 = arith.addf %38, %44 : vector<2x8xf32>
      %cst_29 = arith.constant 0.797884583 : f32
      %46 = vector.broadcast %cst_29 : f32 to vector<2x8xf32>
      %47 = arith.mulf %46, %45 : vector<2x8xf32>
      %48 = math.tanh %47 : vector<2x8xf32>
      %cst_30 = arith.constant 1.000000e+00 : f32
      %49 = vector.broadcast %cst_30 : f32 to vector<2x8xf32>
      %50 = arith.addf %49, %48 : vector<2x8xf32>
      %51 = arith.mulf %40, %50 : vector<2x8xf32>
      %c0_31 = arith.constant 0 : index
      %c0_32 = arith.constant 0 : index
      %52 = vector.load %arg8[%c0_31, %c0_32] : memref<8x1xf32, #tpu.memory_space<vmem>>, vector<8x1xf32>
      %cst_33 = arith.constant dense<0.000000e+00> : vector<2x1xf32>
      %53 = tpu.matmul %51, %52, %cst_33 {dimension_numbers = #tpu.dot_dimension_numbers<[1], [0], [0], [1], [0, 0, 1, 1], [], []>} : vector<2x8xf32>, vector<8x1xf32>, vector<2x1xf32> -> vector<2x1xf32>
      %c0_34 = arith.constant 0 : index
      %c0_35 = arith.constant 0 : index
      %54 = vector.load %arg9[%c0_34, %c0_35] : memref<1x1xf32, #tpu.memory_space<vmem>>, vector<1x1xf32>
      %55 = vector.broadcast %54 : vector<1x1xf32> to vector<2x1xf32>
      %56 = arith.addf %53, %55 : vector<2x1xf32>
      %c0_36 = arith.constant 0 : index
      %c0_37 = arith.constant 0 : index
      %57 = vector.load %arg10[%c0_36, %c0_37] : memref<2x1xf32, #tpu.memory_space<vmem>>, vector<2x1xf32>
      tpu.vector_store %arg10[%c0_36, %c0_37], %56 {strides = array<i32>} : memref<2x1xf32, #tpu.memory_space<vmem>>, vector<2x1xf32>,
    } else {
    }
    return
  }
  func.func @transform_0(%arg0: i32, %arg1: i32) -> (i32, i32, i32) {
    %c0_i32 = arith.constant 0 : i32
    %c0_i32_0 = arith.constant 0 : i32
    return %arg0, %arg1, %c0_i32 : i32, i32, i32
  }
  func.func @transform_1(%arg0: i32, %arg1: i32) -> (i32, i32) {
    %c0_i32 = arith.constant 0 : i32
    return %arg0, %arg1 : i32, i32
  }
  func.func @transform_2(%arg0: i32, %arg1: i32) -> (i32, i32) {
    %c0_i32 = arith.constant 0 : i32
    %c0_i32_0 = arith.constant 0 : i32
    %c0_i32_1 = arith.constant 0 : i32
    return %c0_i32, %c0_i32_0 : i32, i32
  }
  func.func @transform_3(%arg0: i32, %arg1: i32) -> (i32, i32) {
    %c0_i32 = arith.constant 0 : i32
    %c0_i32_0 = arith.constant 0 : i32
    %c0_i32_1 = arith.constant 0 : i32
    return %c0_i32, %c0_i32_0 : i32, i32
  }
  func.func @transform_4(%arg0: i32, %arg1: i32) -> (i32, i32) {
    %c0_i32 = arith.constant 0 : i32
    %c0_i32_0 = arith.constant 0 : i32
    %c0_i32_1 = arith.constant 0 : i32
    return %c0_i32, %c0_i32_0 : i32, i32
  }
  func.func @transform_5(%arg0: i32, %arg1: i32) -> (i32, i32) {
    %c0_i32 = arith.constant 0 : i32
    %c0_i32_0 = arith.constant 0 : i32
    %c0_i32_1 = arith.constant 0 : i32
    return %c0_i32, %c0_i32_0 : i32, i32
  }
  func.func @transform_6(%arg0: i32, %arg1: i32) -> (i32, i32) {
    %c0_i32 = arith.constant 0 : i32
    %c0_i32_0 = arith.constant 0 : i32
    %c0_i32_1 = arith.constant 0 : i32
    return %c0_i32, %c0_i32_0 : i32, i32
  }
  func.func @transform_7(%arg0: i32, %arg1: i32) -> (i32, i32) {
    %c0_i32 = arith.constant 0 : i32
    %c0_i32_0 = arith.constant 0 : i32
    %c0_i32_1 = arith.constant 0 : i32
    return %c0_i32, %c0_i32_0 : i32, i32
  }
  func.func @transform_8(%arg0: i32, %arg1: i32) -> (i32, i32) {
    %c0_i32 = arith.constant 0 : i32
    %c0_i32_0 = arith.constant 0 : i32
    return %arg0, %c0_i32 : i32, i32
  }
}

</mosaic_0001>

<llo_original>
// kernel: tpu_custom_call.1
$region0: #{tpu_custom_call.1}
  #allocation0 [shape = 'u32[]', space=smem, size = 0x4, offset = 0x4, fixed_abs, tag = 'smem constant byte address 0x4 - core index']
  #allocation1 [shape = 'u32[144,128]{1,0:T(1,128)}', space=vmem, size = 0x12000, scoped, tag = 'internal scratch']
  #allocation2 [shape = 'f32[2,32]{1,0:T(2,128)}', space=vmem, size = 0x400, scoped, tag = 'scratch operand']
  #allocation3 [shape = 'f32[1,1]{1,0:T(1,128)S(1)}', space=vmem, size = 0x200, scoped, tag = 'scoped memory for tpu_custom_call.1']
  %s0 = inlined_call_operand.vmem [shape: f32[2,8,32], index: 0, kind: input, shape index: {}]
  %s1 = inlined_call_operand.vmem [shape: f32[2,8], index: 1, kind: input, shape index: {}]
  %s2 = inlined_call_operand.vmem [shape: f32[32,16], index: 2, kind: input, shape index: {}]
  %s3 = inlined_call_operand.vmem [shape: f32[1,16], index: 3, kind: input, shape index: {}]
  %s4 = inlined_call_operand.vmem [shape: f32[16,8], index: 4, kind: input, shape index: {}]
  %s5 = inlined_call_operand.vmem [shape: f32[1,8], index: 5, kind: input, shape index: {}]
  %s6 = inlined_call_operand.vmem [shape: f32[8,1], index: 6, kind: input, shape index: {}]
  %s7 = inlined_call_operand.<no memory space> [shape: f32[1,1], index: 7, kind: input, shape index: {}]
  %s8 = inlined_call_operand.vmem [shape: f32[2,1], index: 8, kind: output, shape index: {}]
  %s9 = sld [smem:[#allocation0]]
  $region50: #{tpu_custom_call.1} parent=0
    _
  %s11 = ssub.s32 1, %s9
  %s12 = scalar_select 0, %s11, %s9
  %v13 = vstv %s7
  %14 = vst [vmem:[#allocation3] sm:$0x1] %v13
  // Predicated region
  $region2: #{tpu_custom_call.1} parent=0 // pred_check
    _
  $region3: #{tpu_custom_call.1} parent=0 // pred_check_branch
    %16 = sbr.rel (0) target = $region5
  $region4: #{tpu_custom_call.1} parent=0 // pred_region
    _
  $region5: #{tpu_custom_call.1} parent=0 // pred_fallthru
    _
  // Predicated region
  $region6: #{tpu_custom_call.1} parent=0 // pred_check
    _
  $region7: #{tpu_custom_call.1} parent=0 // pred_check_branch
    %18 = sbr.rel (0) target = $region9
  $region8: #{tpu_custom_call.1} parent=0 // pred_region
    _
  $region9: #{tpu_custom_call.1} parent=0 // pred_fallthru
    _
  // Predicated region
  $region10: #{tpu_custom_call.1} parent=0 // pred_check
    _
  $region11: #{tpu_custom_call.1} parent=0 // pred_check_branch
    %20 = sbr.rel (0) target = $region13
  $region12: #{tpu_custom_call.1} parent=0 // pred_region
    _
  $region13: #{tpu_custom_call.1} parent=0 // pred_fallthru
    _
  // Predicated region
  $region14: #{tpu_custom_call.1} parent=0 // pred_check
    _
  $region15: #{tpu_custom_call.1} parent=0 // pred_check_branch
    %22 = sbr.rel (0) target = $region17
  $region16: #{tpu_custom_call.1} parent=0 // pred_region
    _
  $region17: #{tpu_custom_call.1} parent=0 // pred_fallthru
    _
  // Predicated region
  $region18: #{tpu_custom_call.1} parent=0 // pred_check
    _
  $region19: #{tpu_custom_call.1} parent=0 // pred_check_branch
    %24 = sbr.rel (0) target = $region21
  $region20: #{tpu_custom_call.1} parent=0 // pred_region
    _
  $region21: #{tpu_custom_call.1} parent=0 // pred_fallthru
    _
  // Predicated region
  $region22: #{tpu_custom_call.1} parent=0 // pred_check
    _
  $region23: #{tpu_custom_call.1} parent=0 // pred_check_branch
    %26 = sbr.rel (0) target = $region25
  $region24: #{tpu_custom_call.1} parent=0 // pred_region
    _
  $region25: #{tpu_custom_call.1} parent=0 // pred_fallthru
    _
  // Predicated region
  $region26: #{tpu_custom_call.1} parent=0 // pred_check
    _
  $region27: #{tpu_custom_call.1} parent=0 // pred_check_branch
    %28 = sbr.rel (0) target = $region29
  $region28: #{tpu_custom_call.1} parent=0 // pred_region
    _
  $region29: #{tpu_custom_call.1} parent=0 // pred_fallthru
    _
  // Predicated region
  $region30: #{tpu_custom_call.1} parent=0 // pred_check
    _
  $region31: #{tpu_custom_call.1} parent=0 // pred_check_branch
    %30 = sbr.rel (0) target = $region33
  $region32: #{tpu_custom_call.1} parent=0 // pred_region
    _
  $region33: #{tpu_custom_call.1} parent=0 // pred_fallthru
    _
  %p31 = scmp.eq.s32.totalorder 0, 0
  // Predicated region
  $region34: #{tpu_custom_call.1} parent=0 // pred_check
    %p32 = pneg %p31
  $region35: #{tpu_custom_call.1} parent=0 // pred_check_branch
    %34 = sbr.rel (%p32) target = $region37
  $region36: #{tpu_custom_call.1} parent=0 // pred_region
    %vm35 = vcmask 254976
    %36 = vst.msk [vmem:[#allocation2] sm:$0x3] %vm35, 0.0
  $region37: #{tpu_custom_call.1} parent=0 // pred_fallthru
    _
  %v37 = vld [vmem:[%s0] sm:$0xff]
  %v38 = vld [vmem:[%s0 + $0x8] sm:$0xff]
  %v39 = vld [vmem:[%s1] sm:$0x3]
  %v40 = vlaneseq
  %v41 = vshrl.u32 %v40, 7
  %v42 = vsub.s32 0, %v41
  %v43 = vrot.slane %v39, %v42
  %45 = vbcast.lane.b32.xlu0 %v43, 256
  %v46 = vpop.permute.xlu0 %45
  %v47 = vlaneseq
  %v48 = vshrl.u32 %v47, 7
  %v49 = vsub.s32 1, %v48
  %v50 = vrot.slane %v39, %v49
  %52 = vbcast.lane.b32.xlu0 %v50, 256
  %v53 = vpop.permute.xlu0 %52
  %v54 = vld [vmem:[#allocation2] sm:$0x3]
  %v55 = vmul.f32 %v37, %v46
  %v56 = vmul.f32 %v38, %v53
  %vm57 = vcmask 261120
  %v58 = vsel %vm57, %v55, 0.0
  %v59 = vrot.slane %v58, 4
  %v60 = vadd.f32 %v58, %v59
  %v61 = vrot.slane %v60, 2
  %v62 = vadd.f32 %v60, %v61
  %v63 = vrot.slane %v62, 1
  %v64 = vadd.f32 %v62, %v63
  %v65 = vsel %vm57, %v56, 0.0
  %v66 = vrot.slane %v65, 4
  %v67 = vadd.f32 %v65, %v66
  %v68 = vrot.slane %v67, 2
  %v69 = vadd.f32 %v67, %v68
  %v70 = vrot.slane %v69, 1
  %v71 = vadd.f32 %v69, %v70
  %vm74 = vcmask 1041409
  %v75 = vsel %vm74, %v71, %v64
  %v77 = vadd.f32 %v54, %v75
  %vm78 = vcmask 254976
  %79 = vst.msk [vmem:[#allocation2] sm:$0x3] %vm78, %v77
  // Predicated region
  $region38: #{tpu_custom_call.1} parent=0 // pred_check
    %p80 = pneg %p31
  $region39: #{tpu_custom_call.1} parent=0 // pred_check_branch
    %82 = sbr.rel (%p80) target = $region41
  $region40: #{tpu_custom_call.1} parent=0 // pred_region
    %v83 = vld [vmem:[#allocation2] sm:$0x3]
    %v84 = vld [vmem:[%s2] sm:$0xff]
    %v85 = vld [vmem:[%s2 + $0x8] sm:$0xff]
    %v86 = vld [vmem:[%s2 + $0x10] sm:$0xff]
    %v87 = vld [vmem:[%s2 + $0x18] sm:$0xff]
    %v88 = vld [vmem:[%s3] sm:$0x1]
    %v90 = vlaneseq
    %v91 = vshrl.u32 %v90, 7
    %v92 = vsub.s32 0, %v91
    %v93 = vrot.slane %v88, %v92
    %v96 = vsel %vm57, %v83, 0
    %98 = vmatprep.subr.mxu0 0.0
    %99 = vmatpush1.msra.mxu0 %v84
    %100 = vmatprep.subr.mxu0 0.0
    %101 = vmatpush1.msra.mxu0 %v85
    %102 = vmatprep.subr.mxu0 0.0
    %103 = vmatpush1.msra.mxu0 %v86
    %104 = vmatprep.subr.mxu0 0.0
    %105 = vmatpush1.msra.mxu0 %v87
    %106 = vmatprep.subr.mxu0 0.0
    %107 = vmatpush1.msra.mxu0 0.0
    %108 = vmatprep.subr.mxu0 0.0
    %109 = vmatpush1.msra.mxu0 0.0
    %110 = vmatprep.subr.mxu0 0.0
    %111 = vmatpush1.msra.mxu0 0.0
    %112 = vmatprep.subr.mxu0 0.0
    %113 = vmatpush1.msra.mxu0 0.0
    %114 = vmatprep.subr.mxu0 0.0
    %115 = vmatpush1.msra.mxu0 0.0
    %116 = vmatprep.subr.mxu0 0.0
    %117 = vmatpush1.msra.mxu0 0.0
    %118 = vmatprep.subr.mxu0 0.0
    %119 = vmatpush1.msra.mxu0 0.0
    %120 = vmatprep.subr.mxu0 0.0
    %121 = vmatpush1.msra.mxu0 0.0
    %122 = vmatprep.subr.mxu0 0.0
    %123 = vmatpush1.msra.mxu0 0.0
    %124 = vmatprep.subr.mxu0 0.0
    %125 = vmatpush1.msra.mxu0 0.0
    %126 = vmatprep.subr.mxu0 0.0
    %127 = vmatpush1.msra.mxu0 0.0
    %128 = vmatprep.subr.mxu0 0.0
    %129 = vmatpush1.msra.mxu0 0.0
    %130 = vmatprep.subr.mxu0 0.0
    %131 = vmatpush1.msra.mxu0 0.0
    %132 = vmatprep.subr.mxu0 0.0
    %133 = vmatpush1.msra.mxu0 0.0
    %134 = vmatprep.subr.mxu0 0.0
    %135 = vmatpush1.msra.mxu0 0.0
    %136 = vmatprep.subr.mxu0 0.0
    %137 = vmatpush1.msra.mxu0 0.0
    %138 = vmatprep.subr.mxu0 0.0
    %139 = vmatpush1.msra.mxu0 0.0
    %140 = vmatprep.subr.mxu0 0.0
    %141 = vmatpush1.msra.mxu0 0.0
    %142 = vmatprep.subr.mxu0 0.0
    %143 = vmatpush1.msra.mxu0 0.0
    %144 = vmatprep.subr.mxu0 0.0
    %145 = vmatpush1.msra.mxu0 0.0
    %146 = vmatprep.subr.mxu0 0.0
    %147 = vmatpush1.msra.mxu0 0.0
    %148 = vmatprep.subr.mxu0 0.0
    %149 = vmatpush1.msra.mxu0 0.0
    %150 = vmatprep.subr.mxu0 0.0
    %151 = vmatpush1.msra.mxu0 0.0
    %152 = vmatprep.subr.mxu0 0.0
    %153 = vmatpush1.msra.mxu0 0.0
    %154 = vmatprep.subr.mxu0 0.0
    %155 = vmatpush1.msra.mxu0 0.0
    %156 = vmatprep.subr.mxu0 0.0
    %157 = vmatpush1.msra.mxu0 0.0
    %158 = vmatprep.subr.mxu0 0.0
    %159 = vmatpush1.msra.mxu0 0.0
    %160 = vmatprep.subr.mxu0 0.0
    %161 = vmatpush1.msra.mxu0 0.0
    %162 = vmatprep.mubr.f32.mxu0 0.0
    %163 = vmatmul.mubr.f32.gmra.mrb[0].mxu0 %v96
    %v164 = vpop.f32.mrb[0].mxu0
    %v165 = vadd.f32 %v93, %v164
    %v166 = vpop.f32.mrb[0].mxu0
    %167 = vdwg.mxu0
    %v168 = vmul.f32 %v165, 0.5
    %v169 = vmul.f32 %v165, 0.044715
    %v170 = vmul.f32 %v169, %v165
    %v171 = vmul.f32 %v170, %v165
    %v172 = vadd.f32 %v165, %v171
    %v173 = vmul.f32 %v172, 0.7978846
    %v174 = vtanh.pop %v173
    %v175 = vadd.f32 %v174, 1.0
    %v176 = vmul.f32 %v168, %v175
    %v177 = vld [vmem:[%s4] sm:$0xff]
    %v178 = vld [vmem:[%s4 + $0x8] sm:$0xff]
    %v179 = vld [vmem:[%s5] sm:$0x1]
    %v181 = vlaneseq
    %v182 = vshrl.u32 %v181, 7
    %v183 = vsub.s32 0, %v182
    %v184 = vrot.slane %v179, %v183
    %vm186 = vcmask 130048
    %v188 = vsel %vm186, %v176, 0
    %190 = vmatprep.subr.mxu0 0.0
    %191 = vmatpush1.msra.mxu0 %v177
    %192 = vmatprep.subr.mxu0 0.0
    %193 = vmatpush1.msra.mxu0 %v178
    %194 = vmatprep.subr.mxu0 0.0
    %195 = vmatpush1.msra.mxu0 0.0
    %196 = vmatprep.subr.mxu0 0.0
    %197 = vmatpush1.msra.mxu0 0.0
    %198 = vmatprep.subr.mxu0 0.0
    %199 = vmatpush1.msra.mxu0 0.0
    %200 = vmatprep.subr.mxu0 0.0
    %201 = vmatpush1.msra.mxu0 0.0
    %202 = vmatprep.subr.mxu0 0.0
    %203 = vmatpush1.msra.mxu0 0.0
    %204 = vmatprep.subr.mxu0 0.0
    %205 = vmatpush1.msra.mxu0 0.0
    %206 = vmatprep.subr.mxu0 0.0
    %207 = vmatpush1.msra.mxu0 0.0
    %208 = vmatprep.subr.mxu0 0.0
    %209 = vmatpush1.msra.mxu0 0.0
    %210 = vmatprep.subr.mxu0 0.0
    %211 = vmatpush1.msra.mxu0 0.0
    %212 = vmatprep.subr.mxu0 0.0
    %213 = vmatpush1.msra.mxu0 0.0
    %214 = vmatprep.subr.mxu0 0.0
    %215 = vmatpush1.msra.mxu0 0.0
    %216 = vmatprep.subr.mxu0 0.0
    %217 = vmatpush1.msra.mxu0 0.0
    %218 = vmatprep.subr.mxu0 0.0
    %219 = vmatpush1.msra.mxu0 0.0
    %220 = vmatprep.subr.mxu0 0.0
    %221 = vmatpush1.msra.mxu0 0.0
    %222 = vmatprep.subr.mxu0 0.0
    %223 = vmatpush1.msra.mxu0 0.0
    %224 = vmatprep.subr.mxu0 0.0
    %225 = vmatpush1.msra.mxu0 0.0
    %226 = vmatprep.subr.mxu0 0.0
    %227 = vmatpush1.msra.mxu0 0.0
    %228 = vmatprep.subr.mxu0 0.0
    %229 = vmatpush1.msra.mxu0 0.0
    %230 = vmatprep.subr.mxu0 0.0
    %231 = vmatpush1.msra.mxu0 0.0
    %232 = vmatprep.subr.mxu0 0.0
    %233 = vmatpush1.msra.mxu0 0.0
    %234 = vmatprep.subr.mxu0 0.0
    %235 = vmatpush1.msra.mxu0 0.0
    %236 = vmatprep.subr.mxu0 0.0
    %237 = vmatpush1.msra.mxu0 0.0
    %238 = vmatprep.subr.mxu0 0.0
    %239 = vmatpush1.msra.mxu0 0.0
    %240 = vmatprep.subr.mxu0 0.0
    %241 = vmatpush1.msra.mxu0 0.0
    %242 = vmatprep.subr.mxu0 0.0
    %243 = vmatpush1.msra.mxu0 0.0
    %244 = vmatprep.subr.mxu0 0.0
    %245 = vmatpush1.msra.mxu0 0.0
    %246 = vmatprep.subr.mxu0 0.0
    %247 = vmatpush1.msra.mxu0 0.0
    %248 = vmatprep.subr.mxu0 0.0
    %249 = vmatpush1.msra.mxu0 0.0
    %250 = vmatprep.subr.mxu0 0.0
    %251 = vmatpush1.msra.mxu0 0.0
    %252 = vmatprep.subr.mxu0 0.0
    %253 = vmatpush1.msra.mxu0 0.0
    %254 = vmatprep.mubr.f32.mxu0 0.0
    %255 = vmatmul.mubr.f32.gmra.mrb[0].mxu0 %v188
    %v256 = vpop.f32.mrb[0].mxu0
    %v257 = vadd.f32 %v184, %v256
    %v258 = vpop.f32.mrb[0].mxu0
    %259 = vdwg.mxu0
    %v260 = vmul.f32 %v257, 0.5
    %v261 = vmul.f32 %v257, 0.044715
    %v262 = vmul.f32 %v261, %v257
    %v263 = vmul.f32 %v262, %v257
    %v264 = vadd.f32 %v257, %v263
    %v265 = vmul.f32 %v264, 0.7978846
    %v266 = vtanh.pop %v265
    %v267 = vadd.f32 %v266, 1.0
    %v268 = vmul.f32 %v260, %v267
    %v269 = vld [vmem:[%s6] sm:$0xff]
    %v270 = vld [vmem:[#allocation3] sm:$0x1]
    %v272 = vlaneseq
    %v273 = vshrl.u32 %v272, 7
    %v274 = vsub.s32 0, %v273
    %v275 = vrot.slane %v270, %v274
    %vm277 = vcmask 64512
    %v279 = vsel %vm277, %v268, 0
    %281 = vmatprep.subr.mxu0 0.0
    %282 = vmatpush1.msra.mxu0 %v269
    %283 = vmatprep.subr.mxu0 0.0
    %284 = vmatpush1.msra.mxu0 0.0
    %285 = vmatprep.subr.mxu0 0.0
    %286 = vmatpush1.msra.mxu0 0.0
    %287 = vmatprep.subr.mxu0 0.0
    %288 = vmatpush1.msra.mxu0 0.0
    %289 = vmatprep.subr.mxu0 0.0
    %290 = vmatpush1.msra.mxu0 0.0
    %291 = vmatprep.subr.mxu0 0.0
    %292 = vmatpush1.msra.mxu0 0.0
    %293 = vmatprep.subr.mxu0 0.0
    %294 = vmatpush1.msra.mxu0 0.0
    %295 = vmatprep.subr.mxu0 0.0
    %296 = vmatpush1.msra.mxu0 0.0
    %297 = vmatprep.subr.mxu0 0.0
    %298 = vmatpush1.msra.mxu0 0.0
    %299 = vmatprep.subr.mxu0 0.0
    %300 = vmatpush1.msra.mxu0 0.0
    %301 = vmatprep.subr.mxu0 0.0
    %302 = vmatpush1.msra.mxu0 0.0
    %303 = vmatprep.subr.mxu0 0.0
    %304 = vmatpush1.msra.mxu0 0.0
    %305 = vmatprep.subr.mxu0 0.0
    %306 = vmatpush1.msra.mxu0 0.0
    %307 = vmatprep.subr.mxu0 0.0
    %308 = vmatpush1.msra.mxu0 0.0
    %309 = vmatprep.subr.mxu0 0.0
    %310 = vmatpush1.msra.mxu0 0.0
    %311 = vmatprep.subr.mxu0 0.0
    %312 = vmatpush1.msra.mxu0 0.0
    %313 = vmatprep.subr.mxu0 0.0
    %314 = vmatpush1.msra.mxu0 0.0
    %315 = vmatprep.subr.mxu0 0.0
    %316 = vmatpush1.msra.mxu0 0.0
    %317 = vmatprep.subr.mxu0 0.0
    %318 = vmatpush1.msra.mxu0 0.0
    %319 = vmatprep.subr.mxu0 0.0
    %320 = vmatpush1.msra.mxu0 0.0
    %321 = vmatprep.subr.mxu0 0.0
    %322 = vmatpush1.msra.mxu0 0.0
    %323 = vmatprep.subr.mxu0 0.0
    %324 = vmatpush1.msra.mxu0 0.0
    %325 = vmatprep.subr.mxu0 0.0
    %326 = vmatpush1.msra.mxu0 0.0
    %327 = vmatprep.subr.mxu0 0.0
    %328 = vmatpush1.msra.mxu0 0.0
    %329 = vmatprep.subr.mxu0 0.0
    %330 = vmatpush1.msra.mxu0 0.0
    %331 = vmatprep.subr.mxu0 0.0
    %332 = vmatpush1.msra.mxu0 0.0
    %333 = vmatprep.subr.mxu0 0.0
    %334 = vmatpush1.msra.mxu0 0.0
    %335 = vmatprep.subr.mxu0 0.0
    %336 = vmatpush1.msra.mxu0 0.0
    %337 = vmatprep.subr.mxu0 0.0
    %338 = vmatpush1.msra.mxu0 0.0
    %339 = vmatprep.subr.mxu0 0.0
    %340 = vmatpush1.msra.mxu0 0.0
    %341 = vmatprep.subr.mxu0 0.0
    %342 = vmatpush1.msra.mxu0 0.0
    %343 = vmatprep.subr.mxu0 0.0
    %344 = vmatpush1.msra.mxu0 0.0
    %345 = vmatprep.mubr.f32.mxu0 0.0
    %346 = vmatmul.mubr.f32.gmra.mrb[0].mxu0 %v279
    %v347 = vpop.f32.mrb[0].mxu0
    %v348 = vadd.f32 %v275, %v347
    %v349 = vpop.f32.mrb[0].mxu0
    %350 = vdwg.mxu0
    %vm351 = vcmask 1024
    %352 = vst.msk [vmem:[%s8] sm:$0x3] %vm351, %v348
  $region41: #{tpu_custom_call.1} parent=0 // pred_fallthru
    _
  // Predicated region
  $region42: #{tpu_custom_call.1} parent=0 // pred_check
    _
  $region43: #{tpu_custom_call.1} parent=0 // pred_check_branch
    %354 = sbr.rel (0) target = $region45
  $region44: #{tpu_custom_call.1} parent=0 // pred_region
    _
  $region45: #{tpu_custom_call.1} parent=0 // pred_fallthru
    _
  // Predicated region
  $region46: #{tpu_custom_call.1} parent=0 // pred_check
    _
  $region47: #{tpu_custom_call.1} parent=0 // pred_check_branch
    %356 = sbr.rel (0) target = $region49
  $region48: #{tpu_custom_call.1} parent=0 // pred_region
    _
  $region49: #{tpu_custom_call.1} parent=0 // pred_fallthru
    _

</llo_original>
